<compile_context>
chip_gen: v5e
topology: v5e:2x2
jax: 0.10.0
libtpu: 0.0.40
codegen_flags: <defaults>
</compile_context>

<pallas_src>
import functools

import jax
import jax.numpy as jnp
from jax.experimental import pallas as pl
from jax.experimental.pallas import tpu as pltpu


def _round_up(x, m):
    return (x + m - 1) // m * m


def _cdiv(a, b):
    return (a + b - 1) // b


def _tpu_defaults():
    """Generation-aware (vmem_limit_bytes, tile_b_target, force_two_batch_tiles)."""
    cap = None
    try:
        cap = getattr(pltpu.get_tpu_info(), "vmem_capacity_bytes", None)
    except Exception:
        cap = None
    kind = ""
    try:
        kind = jax.devices()[0].device_kind.lower()
    except Exception:
        pass
    is_v7 = "v7" in kind
    if cap is None:
        # v5e/v6e: 128 MiB physical VMEM per TC; be conservative elsewhere (v7x: 64 MiB).
        cap = 128 * 1024 * 1024 if ("v5" in kind or "v6" in kind) else 64 * 1024 * 1024
    # Leave ~18% headroom for compiler-internal scratch/semaphores; never request
    # the entire physical VMEM (important on v7x where cap == 64 MiB).
    vmem_limit = min(int(cap * 0.82), 104 * 1024 * 1024)
    # Weights are re-streamed from HBM once per batch tile, so bigger batch tiles
    # on the 128 MiB parts; 256 on v7x so two tiles (one per TC) fit 64 MiB.
    tile_b_target = 256 if is_v7 else 512
    return vmem_limit, tile_b_target, is_v7


def _choose_tiles(B, Hp, tb_target, tk_target, vmem_budget, want_two_batch_tiles):
    """Pick (tile_b, B_pad, tile_k) that fit the VMEM budget."""
    # Balanced batch tiling: padding waste bounded to <16 rows per tile.
    n_b = max(1, _cdiv(B, tb_target))
    if want_two_batch_tiles and n_b == 1 and B >= 32:
        n_b = 2  # feed both v7x TensorCores on the "parallel" batch axis
    tb = _round_up(_cdiv(B, n_b), 16)  # 16: bf16 sublane packing of the x scratch

    def tile_k_for(target):
        if Hp <= target:
            return Hp
        for cand in (1024, 512, 256, 128):
            if cand <= target and Hp % cand == 0:
                return cand
        return Hp

    def footprint(tb_, tk_):
        # 2x double-buffered f32 x + out, f32 acc + bf16 x scratch, double-buffered
        # bf16 W1/W2 slices, small biases.
        return 22 * tb_ * Hp + 8 * tk_ * Hp + 8 * (Hp + tk_)

    tk = tile_k_for(tk_target)
    # Shrink tk before tb (tk only costs per-step overhead; tb sets FLOP/byte).
    while footprint(tb, tk) > vmem_budget and tk > 128 and Hp % (tk // 2) == 0:
        tk //= 2
    while footprint(tb, tk) > vmem_budget and tb > 16:
        tb = max(16, _round_up(tb // 2, 16))
    B_pad = _round_up(B, tb)
    return tb, B_pad, tk


def residual_block_kernel(x_ref, w1_ref, b1_ref, w2_ref, b2_ref, o_ref, acc_ref, xbf_ref):
    """One (tile_b, Hp) batch tile; grid axis 1 tiles the intermediate hidden dim.

    k == 0:       zero the f32 accumulator, cast x tile to bf16 once (reused all k)
    per k step:   h_k  = relu(x_bf @ W1[:, k] + b1[k])   (tile_b, tk)  bf16 MXU, f32 acc
                  acc += h_k @ W2[k, :]                   (tile_b, Hp)
    last k step:  out  = relu(acc + b2 + x)               (residual in f32)
    """
    k = pl.program_id(1)
    nk = pl.num_programs(1)

    @pl.when(k == 0)
    def _():
        acc_ref[...] = jnp.zeros_like(acc_ref)
        xbf_ref[...] = x_ref[...].astype(jnp.bfloat16)

    h = jnp.dot(xbf_ref[...], w1_ref[...], preferred_element_type=jnp.float32)
    h = jnp.maximum(h + b1_ref[...].astype(jnp.float32), 0.0)
    acc_ref[...] += jnp.dot(
        h.astype(jnp.bfloat16), w2_ref[...], preferred_element_type=jnp.float32
    )

    @pl.when(k == nk - 1)
    def _():
        out = acc_ref[...] + b2_ref[...].astype(jnp.float32) + x_ref[...].astype(jnp.float32)
        o_ref[...] = jnp.maximum(out, 0.0).astype(o_ref.dtype)


def prepare_params(w1_t, b1, w2_t, b2):
    """One-time param prep: pad H to a multiple of 128 and cast weights to bf16.

    Hoists the weight->bf16 cast (a full HBM pass) out of the per-call jitted
    forward; call this once at init and reuse the returned tuple.
    """
    H = w1_t.shape[0]
    Hp = _round_up(H, 128)
    b1 = jnp.asarray(b1, jnp.float32).reshape(1, -1)
    b2 = jnp.asarray(b2, jnp.float32).reshape(1, -1)
    if Hp != H:
        pad = Hp - H
        w1_t = jnp.pad(w1_t, ((0, pad), (0, pad)))
        w2_t = jnp.pad(w2_t, ((0, pad), (0, pad)))
        b1 = jnp.pad(b1, ((0, 0), (0, pad)))
        b2 = jnp.pad(b2, ((0, 0), (0, pad)))
    return (w1_t.astype(jnp.bfloat16), b1, w2_t.astype(jnp.bfloat16), b2)


@functools.partial(jax.jit, static_argnames=("tile_b", "tile_k"))
def residual_block(x, w1_bf, b1, w2_bf, b2, *, tile_b=None, tile_k=512):
    """x: [B, H] f32; (w1_bf, b1, w2_bf, b2) from prepare_params() ([Hp, Hp] bf16, [1, Hp] f32)."""
    B, H = x.shape
    Hp = w1_bf.shape[0]

    vmem_limit, tb_target, is_v7 = _tpu_defaults()
    if tile_b is not None:
        tb_target = tile_b
    tb, B_pad, tk = _choose_tiles(B, Hp, tb_target, tile_k, int(vmem_limit * 0.9), is_v7)

    x_in = x
    if B_pad != B or Hp != H:
        x_in = jnp.pad(x, ((0, B_pad - B), (0, Hp - H)))

    grid = (B_pad // tb, Hp // tk)
    n_batch_tiles = grid[0]

    cost = pl.CostEstimate(
        flops=4 * B_pad * Hp * Hp,
        transcendentals=0,
        bytes_accessed=int(
            n_batch_tiles * 2 * Hp * Hp * 2   # bf16 W1+W2 re-streamed once per batch tile
            + 2 * B_pad * Hp * 4              # x read + out write (f32)
            + n_batch_tiles * 2 * Hp * 4      # biases
        ),
    )

    # TODO(synk): optional few-% sweeps — pl.Buffered(3) on the weight slices when
    # tk <= 256, pl.Buffered(1) on x/out for very large H on v7x.
    out = pl.pallas_call(
        residual_block_kernel,
        out_shape=jax.ShapeDtypeStruct((B_pad, Hp), x.dtype),
        grid_spec=pltpu.PrefetchScalarGridSpec(
            num_scalar_prefetch=0,
            grid=grid,
            in_specs=[
                pl.BlockSpec((tb, Hp), lambda i, k: (i, 0)),   # x tile (resident over k)
                pl.BlockSpec((Hp, tk), lambda i, k: (0, k)),   # W1^T k-slice (bf16)
                pl.BlockSpec((1, tk), lambda i, k: (0, k)),    # b1 k-slice
                pl.BlockSpec((tk, Hp), lambda i, k: (k, 0)),   # W2^T k-slice (bf16)
                pl.BlockSpec((1, Hp), lambda i, k: (0, 0)),    # b2 (full, last step only)
            ],
            out_specs=pl.BlockSpec((tb, Hp), lambda i, k: (i, 0)),
            scratch_shapes=[
                pltpu.VMEM((tb, Hp), jnp.float32),   # f32 accumulator
                pltpu.VMEM((tb, Hp), jnp.bfloat16),  # x cast once per batch tile
            ],
        ),
        compiler_params=pltpu.CompilerParams(
            dimension_semantics=("parallel", "arbitrary"),
            vmem_limit_bytes=vmem_limit,
        ),
        cost_estimate=cost,
    )(x_in, w1_bf, b1, w2_bf, b2)

    if B_pad != B or Hp != H:
        out = out[:B, :H]
    return out


def init_linear_params(key, hidden_dim):
    """Deterministic init mimicking nn.Linear default (uniform +/- 1/sqrt(fan_in))."""
    kw, kb = jax.random.split(key)
    bound = 1.0 / jnp.sqrt(hidden_dim)
    # torch stores W as [out, in]; we keep W^T as [in, out] for the kernel.
    w_t = jax.random.uniform(kw, (hidden_dim, hidden_dim), jnp.float32, -bound, bound)
    b = jax.random.uniform(kb, (1, hidden_dim), jnp.float32, -bound, bound)
    return w_t, b


def _reference(x, w1_t, b1, w2_t, b2):
    return jnp.maximum(jnp.maximum(x @ w1_t + b1, 0.0) @ w2_t + b2 + x, 0.0)


if __name__ == "__main__":
    key = jax.random.PRNGKey(0)

    # Small but lane-dense shapes (H multiple of 128 avoids masked partial stores).
    # Second config exercises batch padding and the multi-step k reduction.
    for (batch, hidden, tk) in ((16, 128, 512), (20, 256, 128)):
        k_x, k_l1, k_l2, key = jax.random.split(key, 4)
        x = jax.random.normal(k_x, (batch, hidden), jnp.float32)
        w1_t, b1 = init_linear_params(k_l1, hidden)
        w2_t, b2 = init_linear_params(k_l2, hidden)

        params = prepare_params(w1_t, b1, w2_t, b2)  # one-time bf16 cast / H pad
        out = residual_block(x, *params, tile_k=tk)
        out = jax.block_until_ready(out)

        ref = _reference(x, w1_t, b1, w2_t, b2)
        assert out.shape == (batch, hidden)
        # bf16 MXU operands -> loose tolerance vs the f32 reference (deliberate).
        assert jnp.allclose(out, ref, atol=5e-2, rtol=5e-2), float(
            jnp.max(jnp.abs(out - ref))
        )

    print("KERNEL_OK")
</pallas_src>

<mosaic_0001>
module attributes {stable_mosaic.version = 11 : i64} {
  func.func @residual_block_kernel(%arg0: i32, %arg1: i32, %arg2: memref<16x128xf32, #tpu.memory_space<vmem>>, %arg3: memref<128x128xbf16, #tpu.memory_space<vmem>>, %arg4: memref<1x128xf32, #tpu.memory_space<vmem>>, %arg5: memref<128x128xbf16, #tpu.memory_space<vmem>>, %arg6: memref<1x128xf32, #tpu.memory_space<vmem>>, %arg7: memref<16x128xf32, #tpu.memory_space<vmem>>, %arg8: memref<16x128xf32, #tpu.memory_space<vmem>>, %arg9: memref<16x128xbf16, #tpu.memory_space<vmem>>) attributes {dimension_semantics = [#tpu.dimension_semantics<parallel>, #tpu.dimension_semantics<arbitrary>], iteration_bounds = array<i64: 1, 1>, scalar_prefetch = 0 : i64, scratch_operands = 2 : i64, tpu.core_type = #tpu.core_type<tc>, window_params = [{transform_indices = @transform_0, window_bounds = array<i64: 16, 128>}, {transform_indices = @transform_1, window_bounds = array<i64: 128, 128>}, {transform_indices = @transform_2, window_bounds = array<i64: 1, 128>}, {transform_indices = @transform_3, window_bounds = array<i64: 128, 128>}, {pipeline_mode = #tpu.pipeline_mode<synchronous>, transform_indices = @transform_4, window_bounds = array<i64: 1, 128>}, {transform_indices = @transform_5, window_bounds = array<i64: 16, 128>}]} {
    %c0_i32 = arith.constant 0 : i32
    %0 = arith.cmpi eq, %arg1, %c0_i32 : i32
    %1 = arith.extui %0 : i1 to i32
    %c0_i32_0 = arith.constant 0 : i32
    %2 = arith.cmpi ne, %1, %c0_i32_0 : i32
    scf.if %2 {
      %cst_16 = arith.constant 0.000000e+00 : f32
      %20 = vector.broadcast %cst_16 : f32 to vector<16x128xf32>
      %c0_17 = arith.constant 0 : index
      %c0_18 = arith.constant 0 : index
      %21 = vector.load %arg8[%c0_17, %c0_18] : memref<16x128xf32, #tpu.memory_space<vmem>>, vector<16x128xf32>
      tpu.vector_store %arg8[%c0_17, %c0_18], %20 {strides = array<i32>} : memref<16x128xf32, #tpu.memory_space<vmem>>, vector<16x128xf32>,
      %c0_19 = arith.constant 0 : index
      %c0_20 = arith.constant 0 : index
      %22 = vector.load %arg2[%c0_19, %c0_20] : memref<16x128xf32, #tpu.memory_space<vmem>>, vector<16x128xf32>
      %23 = arith.truncf %22 : vector<16x128xf32> to vector<16x128xbf16>
      %c0_21 = arith.constant 0 : index
      %c0_22 = arith.constant 0 : index
      %24 = vector.load %arg9[%c0_21, %c0_22] : memref<16x128xbf16, #tpu.memory_space<vmem>>, vector<16x128xbf16>
      tpu.vector_store %arg9[%c0_21, %c0_22], %23 {strides = array<i32>} : memref<16x128xbf16, #tpu.memory_space<vmem>>, vector<16x128xbf16>,
    } else {
    }
    %c0 = arith.constant 0 : index
    %c0_1 = arith.constant 0 : index
    %3 = vector.load %arg9[%c0, %c0_1] : memref<16x128xbf16, #tpu.memory_space<vmem>>, vector<16x128xbf16>
    %c0_2 = arith.constant 0 : index
    %c0_3 = arith.constant 0 : index
    %4 = vector.load %arg3[%c0_2, %c0_3] : memref<128x128xbf16, #tpu.memory_space<vmem>>, vector<128x128xbf16>
    %cst = arith.constant dense<0.000000e+00> : vector<16x128xf32>
    %5 = tpu.matmul %3, %4, %cst {dimension_numbers = #tpu.dot_dimension_numbers<[1], [0], [0], [1], [0, 0, 1, 1], [], []>} : vector<16x128xbf16>, vector<128x128xbf16>, vector<16x128xf32> -> vector<16x128xf32>
    %c0_4 = arith.constant 0 : index
    %c0_5 = arith.constant 0 : index
    %6 = vector.load %arg4[%c0_4, %c0_5] : memref<1x128xf32, #tpu.memory_space<vmem>>, vector<1x128xf32>
    %7 = vector.broadcast %6 : vector<1x128xf32> to vector<16x128xf32>
    %8 = arith.addf %5, %7 : vector<16x128xf32>
    %cst_6 = arith.constant 0.000000e+00 : f32
    %9 = vector.broadcast %cst_6 : f32 to vector<16x128xf32>
    %10 = arith.maximumf %8, %9 : vector<16x128xf32>
    %c0_7 = arith.constant 0 : index
    %c0_8 = arith.constant 0 : index
    %11 = vector.load %arg8[%c0_7, %c0_8] : memref<16x128xf32, #tpu.memory_space<vmem>>, vector<16x128xf32>
    %12 = arith.truncf %10 : vector<16x128xf32> to vector<16x128xbf16>
    %c0_9 = arith.constant 0 : index
    %c0_10 = arith.constant 0 : index
    %13 = vector.load %arg5[%c0_9, %c0_10] : memref<128x128xbf16, #tpu.memory_space<vmem>>, vector<128x128xbf16>
    %cst_11 = arith.constant dense<0.000000e+00> : vector<16x128xf32>
    %14 = tpu.matmul %12, %13, %cst_11 {dimension_numbers = #tpu.dot_dimension_numbers<[1], [0], [0], [1], [0, 0, 1, 1], [], []>} : vector<16x128xbf16>, vector<128x128xbf16>, vector<16x128xf32> -> vector<16x128xf32>
    %15 = arith.addf %11, %14 : vector<16x128xf32>
    %c0_12 = arith.constant 0 : index
    %c0_13 = arith.constant 0 : index
    %16 = vector.load %arg8[%c0_12, %c0_13] : memref<16x128xf32, #tpu.memory_space<vmem>>, vector<16x128xf32>
    tpu.vector_store %arg8[%c0_12, %c0_13], %15 {strides = array<i32>} : memref<16x128xf32, #tpu.memory_space<vmem>>, vector<16x128xf32>,
    %c0_i32_14 = arith.constant 0 : i32
    %17 = arith.cmpi eq, %arg1, %c0_i32_14 : i32
    %18 = arith.extui %17 : i1 to i32
    %c0_i32_15 = arith.constant 0 : i32
    %19 = arith.cmpi ne, %18, %c0_i32_15 : i32
    scf.if %19 {
      %c0_16 = arith.constant 0 : index
      %c0_17 = arith.constant 0 : index
      %20 = vector.load %arg8[%c0_16, %c0_17] : memref<16x128xf32, #tpu.memory_space<vmem>>, vector<16x128xf32>
      %c0_18 = arith.constant 0 : index
      %c0_19 = arith.constant 0 : index
      %21 = vector.load %arg6[%c0_18, %c0_19] : memref<1x128xf32, #tpu.memory_space<vmem>>, vector<1x128xf32>
      %22 = vector.broadcast %21 : vector<1x128xf32> to vector<16x128xf32>
      %23 = arith.addf %20, %22 : vector<16x128xf32>
      %c0_20 = arith.constant 0 : index
      %c0_21 = arith.constant 0 : index
      %24 = vector.load %arg2[%c0_20, %c0_21] : memref<16x128xf32, #tpu.memory_space<vmem>>, vector<16x128xf32>
      %25 = arith.addf %23, %24 : vector<16x128xf32>
      %cst_22 = arith.constant 0.000000e+00 : f32
      %26 = vector.broadcast %cst_22 : f32 to vector<16x128xf32>
      %27 = arith.maximumf %25, %26 : vector<16x128xf32>
      %c0_23 = arith.constant 0 : index
      %c0_24 = arith.constant 0 : index
      %28 = vector.load %arg7[%c0_23, %c0_24] : memref<16x128xf32, #tpu.memory_space<vmem>>, vector<16x128xf32>
      tpu.vector_store %arg7[%c0_23, %c0_24], %27 {strides = array<i32>} : memref<16x128xf32, #tpu.memory_space<vmem>>, vector<16x128xf32>,
    } else {
    }
    return
  }
  func.func @transform_0(%arg0: i32, %arg1: i32) -> (i32, i32) {
    %c0_i32 = arith.constant 0 : i32
    %c0_i32_0 = arith.constant 0 : i32
    return %arg0, %c0_i32 : i32, i32
  }
  func.func @transform_1(%arg0: i32, %arg1: i32) -> (i32, i32) {
    %c0_i32 = arith.constant 0 : i32
    %c0_i32_0 = arith.constant 0 : i32
    return %c0_i32, %arg1 : i32, i32
  }
  func.func @transform_2(%arg0: i32, %arg1: i32) -> (i32, i32) {
    %c0_i32 = arith.constant 0 : i32
    %c0_i32_0 = arith.constant 0 : i32
    return %c0_i32, %arg1 : i32, i32
  }
  func.func @transform_3(%arg0: i32, %arg1: i32) -> (i32, i32) {
    %c0_i32 = arith.constant 0 : i32
    %c0_i32_0 = arith.constant 0 : i32
    return %arg1, %c0_i32 : i32, i32
  }
  func.func @transform_4(%arg0: i32, %arg1: i32) -> (i32, i32) {
    %c0_i32 = arith.constant 0 : i32
    %c0_i32_0 = arith.constant 0 : i32
    %c0_i32_1 = arith.constant 0 : i32
    return %c0_i32, %c0_i32_0 : i32, i32
  }
  func.func @transform_5(%arg0: i32, %arg1: i32) -> (i32, i32) {
    %c0_i32 = arith.constant 0 : i32
    %c0_i32_0 = arith.constant 0 : i32
    return %arg0, %c0_i32 : i32, i32
  }
}

</mosaic_0001>

<llo_original>
// kernel: residual_block.1
$region0: #{residual_block.1}
  #allocation0 [shape = 'u32[]', space=smem, size = 0x4, offset = 0x4, fixed_abs, tag = 'smem constant byte address 0x4 - core index']
  #allocation1 [shape = 'u32[72,128]{1,0:T(1,128)}', space=vmem, size = 0x9000, scoped, tag = 'internal scratch']
  #allocation2 [shape = 'f32[16,128]{1,0:T(8,128)}', space=vmem, size = 0x2000, scoped, tag = 'scratch operand']
  #allocation3 [shape = 'bf16[16,128]{1,0:T(8,128)(2,1)}', space=vmem, size = 0x1000, scoped, tag = 'scratch operand']
  %s0 = inlined_call_operand.hbm [shape: f32[16,128], index: 0, kind: input, shape index: {}]
  %s1 = inlined_call_operand.hbm [shape: bf16[128,128], index: 1, kind: input, shape index: {}]
  %s2 = inlined_call_operand.vmem [shape: f32[1,128], index: 2, kind: input, shape index: {}]
  %s3 = inlined_call_operand.hbm [shape: bf16[128,128], index: 3, kind: input, shape index: {}]
  %s4 = inlined_call_operand.vmem [shape: f32[1,128], index: 4, kind: input, shape index: {}]
  %s5 = inlined_call_operand.hbm [shape: f32[16,128], index: 5, kind: output, shape index: {}]
  %s6 = sld [smem:[#allocation0]]
  $region50: #{residual_block.1} parent=0
    _
  %s8 = ssub.s32 1, %s6
  %s9 = scalar_select 0, %s8, %s6
  $region1: #{residual_block.1} parent=0
    #allocation4 [shape = 'u8[8192]{0}', space=vmem, size = 0x2000, scoped, tag = 'input window, operand 0, single buffered']
    #allocation5 [shape = 's32[1]{0}', space=sflag, size = 0x4, scoped, tag = 'scoped memory for residual_block.1']
    #allocation6 [shape = 's32[1]{0}', space=sflag, size = 0x4, scoped, tag = 'scoped memory for residual_block.1']
    #allocation7 [shape = 'u8[32768]{0}', space=vmem, size = 0x8000, scoped, tag = 'input window, operand 1, single buffered']
    #allocation8 [shape = 's32[1]{0}', space=sflag, size = 0x4, scoped, tag = 'scoped memory for residual_block.1']
    #allocation9 [shape = 'u8[32768]{0}', space=vmem, size = 0x8000, scoped, tag = 'input window, operand 3, single buffered']
    #allocation10 [shape = 'u8[8192]{0}', space=vmem, size = 0x2000, scoped, tag = 'output window, operand 0, single buffered']
    %10 = vsyncpa [#allocation5], 0
    %11 = vsyncpa [#allocation8], 0
    %12 = vsyncpa [#allocation6], 0
    // Predicated region
    $region2: #{residual_block.1} parent=1 // pred_check
      _
    $region3: #{residual_block.1} parent=1 // pred_check_branch
      %14 = sbr.rel (0) target = $region5
    $region4: #{residual_block.1} parent=1 // pred_region
      %16 = vsyncadd [#allocation5], 0
      %s17 = sshll.u32 %s0, 4
      %s18 = int_to_ptr.hbm [resolvable:$true] %s17
      %s19 = sshll.u32 [#allocation4], 4
      %s20 = int_to_ptr.vmem [resolvable:$true] %s19
      %25 = dma.hbm_to_vmem [thread:$0]  %s18, 256, %s20, [#allocation5], 128, 128, 8
    $region5: #{residual_block.1} parent=1 // pred_fallthru
      _
    // Predicated region
    $region6: #{residual_block.1} parent=1 // pred_check
      _
    $region7: #{residual_block.1} parent=1 // pred_check_branch
      %27 = sbr.rel (0) target = $region9
    $region8: #{residual_block.1} parent=1 // pred_region
      %29 = vsyncadd [#allocation8], 0
      %s30 = sshll.u32 %s1, 4
      %s31 = int_to_ptr.hbm [resolvable:$true] %s30
      %s32 = sshll.u32 [#allocation7], 4
      %s33 = int_to_ptr.vmem [resolvable:$true] %s32
      %38 = dma.hbm_to_vmem [thread:$0]  %s31, 1024, %s33, [#allocation8], 64, 64, 4
    $region9: #{residual_block.1} parent=1 // pred_fallthru
      _
    // Predicated region
    $region10: #{residual_block.1} parent=1 // pred_check
      _
    $region11: #{residual_block.1} parent=1 // pred_check_branch
      %40 = sbr.rel (0) target = $region13
    $region12: #{residual_block.1} parent=1 // pred_region
      _
    $region13: #{residual_block.1} parent=1 // pred_fallthru
      _
    // Predicated region
    $region14: #{residual_block.1} parent=1 // pred_check
      _
    $region15: #{residual_block.1} parent=1 // pred_check_branch
      %42 = sbr.rel (0) target = $region17
    $region16: #{residual_block.1} parent=1 // pred_region
      %44 = vsyncadd [#allocation8], 0
      %s45 = sshll.u32 %s3, 4
      %s46 = int_to_ptr.hbm [resolvable:$true] %s45
      %s47 = sshll.u32 [#allocation9], 4
      %s48 = int_to_ptr.vmem [resolvable:$true] %s47
      %53 = dma.hbm_to_vmem [thread:$0]  %s46, 1024, %s48, [#allocation8], 64, 64, 4
    $region17: #{residual_block.1} parent=1 // pred_fallthru
      _
    // Predicated region
    $region18: #{residual_block.1} parent=1 // pred_check
      _
    $region19: #{residual_block.1} parent=1 // pred_check_branch
      %55 = sbr.rel (0) target = $region21
    $region20: #{residual_block.1} parent=1 // pred_region
      _
    $region21: #{residual_block.1} parent=1 // pred_fallthru
      _
    // Predicated region
    $region22: #{residual_block.1} parent=1 // pred_check
      _
    $region23: #{residual_block.1} parent=1 // pred_check_branch
      %57 = sbr.rel (0) target = $region25
    $region24: #{residual_block.1} parent=1 // pred_region
      %59 = dma.done [#allocation5], 256
    $region25: #{residual_block.1} parent=1 // pred_fallthru
      _
    // Predicated region
    $region26: #{residual_block.1} parent=1 // pred_check
      _
    $region27: #{residual_block.1} parent=1 // pred_check_branch
      %61 = sbr.rel (0) target = $region29
    $region28: #{residual_block.1} parent=1 // pred_region
      %63 = dma.done [#allocation8], 1024
    $region29: #{residual_block.1} parent=1 // pred_fallthru
      _
    // Predicated region
    $region30: #{residual_block.1} parent=1 // pred_check
      _
    $region31: #{residual_block.1} parent=1 // pred_check_branch
      %65 = sbr.rel (0) target = $region33
    $region32: #{residual_block.1} parent=1 // pred_region
      %67 = dma.done [#allocation8], 1024
    $region33: #{residual_block.1} parent=1 // pred_fallthru
      _
    %p68 = scmp.eq.s32.totalorder 0, 0
    // Predicated region
    $region34: #{residual_block.1} parent=1 // pred_check
      %p69 = pneg %p68
    $region35: #{residual_block.1} parent=1 // pred_check_branch
      %71 = sbr.rel (%p69) target = $region37
    $region36: #{residual_block.1} parent=1 // pred_region
      %72 = vst [vmem:[#allocation2] sm:$0xff] 0.0
      %73 = vst [vmem:[#allocation2 + $0x8] sm:$0xff] 0.0
      %v74 = vld [vmem:[#allocation4] sm:$0xff]
      %v75 = vld [vmem:[#allocation4 + $0x8] sm:$0xff]
      %v76 = vpack.c.bf16 %v74, %v74
      %v77 = vpack.c.bf16 %v75, %v75
      %78 = vst [vmem:[#allocation3] sm:$0xf] %v76
      %79 = vst [vmem:[#allocation3 + $0x4] sm:$0xf] %v77
    $region37: #{residual_block.1} parent=1 // pred_fallthru
      _
    %v80 = vld [vmem:[#allocation3] sm:$0xf]
    %v81 = vld [vmem:[#allocation3 + $0x4] sm:$0xf]
    %v82 = vld [vmem:[#allocation7] sm:$0xf]
    %v83 = vld [vmem:[#allocation7 + $0x4] sm:$0xf]
    %v84 = vld [vmem:[#allocation7 + $0x8] sm:$0xf]
    %v85 = vld [vmem:[#allocation7 + $0xc] sm:$0xf]
    %v86 = vld [vmem:[#allocation7 + $0x10] sm:$0xf]
    %v87 = vld [vmem:[#allocation7 + $0x14] sm:$0xf]
    %v88 = vld [vmem:[#allocation7 + $0x18] sm:$0xf]
    %v89 = vld [vmem:[#allocation7 + $0x1c] sm:$0xf]
    %v90 = vld [vmem:[#allocation7 + $0x20] sm:$0xf]
    %v91 = vld [vmem:[#allocation7 + $0x24] sm:$0xf]
    %v92 = vld [vmem:[#allocation7 + $0x28] sm:$0xf]
    %v93 = vld [vmem:[#allocation7 + $0x2c] sm:$0xf]
    %v94 = vld [vmem:[#allocation7 + $0x30] sm:$0xf]
    %v95 = vld [vmem:[#allocation7 + $0x34] sm:$0xf]
    %v96 = vld [vmem:[#allocation7 + $0x38] sm:$0xf]
    %v97 = vld [vmem:[#allocation7 + $0x3c] sm:$0xf]
    %v98 = vld [vmem:[%s2] sm:$0x1]
    %v100 = vperm.slane %v98, 0
    %v104 = vunpack.c.l.b16 %v80
    %v105 = vunpack.c.l.b16 %v81
    %v106 = vpack.c.b16 %v105, %v104
    %v124 = vunpack.c.l.b16 %v82
    %v125 = vunpack.c.l.b16 %v83
    %v126 = vunpack.c.l.b16 %v84
    %v127 = vunpack.c.l.b16 %v85
    %v128 = vunpack.c.l.b16 %v86
    %v129 = vunpack.c.l.b16 %v87
    %v130 = vunpack.c.l.b16 %v88
    %v131 = vunpack.c.l.b16 %v89
    %v132 = vunpack.c.l.b16 %v90
    %v133 = vunpack.c.l.b16 %v91
    %v134 = vunpack.c.l.b16 %v92
    %v135 = vunpack.c.l.b16 %v93
    %v136 = vunpack.c.l.b16 %v94
    %v137 = vunpack.c.l.b16 %v95
    %v138 = vunpack.c.l.b16 %v96
    %v139 = vunpack.c.l.b16 %v97
    %v140 = vpack.c.b16 %v125, %v124
    %v141 = vpack.c.b16 %v127, %v126
    %v142 = vpack.c.b16 %v129, %v128
    %v143 = vpack.c.b16 %v131, %v130
    %v144 = vpack.c.b16 %v133, %v132
    %v145 = vpack.c.b16 %v135, %v134
    %v146 = vpack.c.b16 %v137, %v136
    %v147 = vpack.c.b16 %v139, %v138
    %156 = vmatpush.bf16.msra.mxu0 %v147
    %157 = vmatpush.bf16.msra.mxu0 %v146
    %158 = vmatpush.bf16.msra.mxu0 %v145
    %159 = vmatpush.bf16.msra.mxu0 %v144
    %160 = vmatpush.bf16.msra.mxu0 %v143
    %161 = vmatpush.bf16.msra.mxu0 %v142
    %162 = vmatpush.bf16.msra.mxu0 %v141
    %163 = vmatpush.bf16.msra.mxu0 %v140
    %164 = vmatmul.bf16.gmra.mxu0 %v106
    %v165 = vpop.f32.mrf.mxu0
    %v166 = vadd.f32 %v100, %v165
    %v167 = vpop.f32.mrf.mxu0
    %v168 = vadd.f32 %v100, %v167
    %169 = vdwg.mxu0
    %v170 = vmax.f32 %v166, 0.0
    %v171 = vmax.f32 %v168, 0.0
    %v172 = vld [vmem:[#allocation2] sm:$0xff]
    %v173 = vld [vmem:[#allocation2 + $0x8] sm:$0xff]
    %v174 = vpack.c.bf16 %v171, %v170
    %v175 = vld [vmem:[#allocation9] sm:$0xf]
    %v176 = vld [vmem:[#allocation9 + $0x4] sm:$0xf]
    %v177 = vld [vmem:[#allocation9 + $0x8] sm:$0xf]
    %v178 = vld [vmem:[#allocation9 + $0xc] sm:$0xf]
    %v179 = vld [vmem:[#allocation9 + $0x10] sm:$0xf]
    %v180 = vld [vmem:[#allocation9 + $0x14] sm:$0xf]
    %v181 = vld [vmem:[#allocation9 + $0x18] sm:$0xf]
    %v182 = vld [vmem:[#allocation9 + $0x1c] sm:$0xf]
    %v183 = vld [vmem:[#allocation9 + $0x20] sm:$0xf]
    %v184 = vld [vmem:[#allocation9 + $0x24] sm:$0xf]
    %v185 = vld [vmem:[#allocation9 + $0x28] sm:$0xf]
    %v186 = vld [vmem:[#allocation9 + $0x2c] sm:$0xf]
    %v187 = vld [vmem:[#allocation9 + $0x30] sm:$0xf]
    %v188 = vld [vmem:[#allocation9 + $0x34] sm:$0xf]
    %v189 = vld [vmem:[#allocation9 + $0x38] sm:$0xf]
    %v190 = vld [vmem:[#allocation9 + $0x3c] sm:$0xf]
    %v207 = vunpack.c.l.b16 %v175
    %v208 = vunpack.c.l.b16 %v176
    %v209 = vunpack.c.l.b16 %v177
    %v210 = vunpack.c.l.b16 %v178
    %v211 = vunpack.c.l.b16 %v179
    %v212 = vunpack.c.l.b16 %v180
    %v213 = vunpack.c.l.b16 %v181
    %v214 = vunpack.c.l.b16 %v182
    %v215 = vunpack.c.l.b16 %v183
    %v216 = vunpack.c.l.b16 %v184
    %v217 = vunpack.c.l.b16 %v185
    %v218 = vunpack.c.l.b16 %v186
    %v219 = vunpack.c.l.b16 %v187
    %v220 = vunpack.c.l.b16 %v188
    %v221 = vunpack.c.l.b16 %v189
    %v222 = vunpack.c.l.b16 %v190
    %v223 = vpack.c.b16 %v208, %v207
    %v224 = vpack.c.b16 %v210, %v209
    %v225 = vpack.c.b16 %v212, %v211
    %v226 = vpack.c.b16 %v214, %v213
    %v227 = vpack.c.b16 %v216, %v215
    %v228 = vpack.c.b16 %v218, %v217
    %v229 = vpack.c.b16 %v220, %v219
    %v230 = vpack.c.b16 %v222, %v221
    %239 = vmatpush.bf16.msra.mxu0 %v230
    %240 = vmatpush.bf16.msra.mxu0 %v229
    %241 = vmatpush.bf16.msra.mxu0 %v228
    %242 = vmatpush.bf16.msra.mxu0 %v227
    %243 = vmatpush.bf16.msra.mxu0 %v226
    %244 = vmatpush.bf16.msra.mxu0 %v225
    %245 = vmatpush.bf16.msra.mxu0 %v224
    %246 = vmatpush.bf16.msra.mxu0 %v223
    %247 = vmatmul.bf16.gmra.mxu0 %v174
    %v248 = vpop.f32.mrf.mxu0
    %v249 = vadd.f32 0.0, %v248
    %v250 = vpop.f32.mrf.mxu0
    %v251 = vadd.f32 0.0, %v250
    %252 = vdwg.mxu0
    %v253 = vadd.f32 %v172, %v249
    %v254 = vadd.f32 %v173, %v251
    %255 = vst [vmem:[#allocation2] sm:$0xff] %v253
    %256 = vst [vmem:[#allocation2 + $0x8] sm:$0xff] %v254
    // Predicated region
    $region38: #{residual_block.1} parent=1 // pred_check
      %p257 = pneg %p68
    $region39: #{residual_block.1} parent=1 // pred_check_branch
      %259 = sbr.rel (%p257) target = $region41
    $region40: #{residual_block.1} parent=1 // pred_region
      %v260 = vld [vmem:[#allocation2] sm:$0xff]
      %v261 = vld [vmem:[#allocation2 + $0x8] sm:$0xff]
      %v262 = vld [vmem:[%s4] sm:$0x1]
      %v264 = vperm.slane %v262, 0
      %v266 = vadd.f32 %v260, %v264
      %v267 = vadd.f32 %v261, %v264
      %v268 = vld [vmem:[#allocation4] sm:$0xff]
      %v269 = vld [vmem:[#allocation4 + $0x8] sm:$0xff]
      %v270 = vadd.f32 %v266, %v268
      %v271 = vadd.f32 %v267, %v269
      %v272 = vmax.f32 %v270, 0.0
      %v273 = vmax.f32 %v271, 0.0
      %274 = vst [vmem:[#allocation10] sm:$0xff] %v272
      %275 = vst [vmem:[#allocation10 + $0x8] sm:$0xff] %v273
    $region41: #{residual_block.1} parent=1 // pred_fallthru
      _
    // Predicated region
    $region42: #{residual_block.1} parent=1 // pred_check
      _
    $region43: #{residual_block.1} parent=1 // pred_check_branch
      %277 = sbr.rel (0) target = $region45
    $region44: #{residual_block.1} parent=1 // pred_region
      %279 = vsyncadd [#allocation6], 0
      %s280 = sshll.u32 [#allocation10], 4
      %s281 = int_to_ptr.vmem [resolvable:$true] %s280
      %s282 = sshll.u32 %s5, 4
      %s283 = int_to_ptr.hbm [resolvable:$true] %s282
      %288 = dma.vmem_to_hbm [thread:$0]  %s281, 256, %s283, [#allocation6], 128, 128, 8
    $region45: #{residual_block.1} parent=1 // pred_fallthru
      _
    // Predicated region
    $region46: #{residual_block.1} parent=1 // pred_check
      _
    $region47: #{residual_block.1} parent=1 // pred_check_branch
      %290 = sbr.rel (0) target = $region49
    $region48: #{residual_block.1} parent=1 // pred_region
      %292 = dma.done [#allocation6], 256
    $region49: #{residual_block.1} parent=1 // pred_fallthru
      _
    %293 = vsyncpa [#allocation5], 1
    %294 = vsyncpa [#allocation8], 1
    %295 = vsyncpa [#allocation6], 1

</llo_original>
